<compile_context>
chip_gen: v5e
topology: v5e:2x2
jax: 0.10.0
libtpu: 0.0.40
codegen_flags: <defaults>
</compile_context>

<pallas_src>
import functools

import jax
import jax.numpy as jnp
from jax.experimental import pallas as pl
from jax.experimental.pallas import tpu as pltpu


# ---------------------------------------------------------------------------
# Kernel
# ---------------------------------------------------------------------------
def highway_kernel(x_ref, w_ref, b_ref, o_ref):
    """One (row_tile, tn) output block.

    x_ref : (row_tile, Dp)  activation row tile (resident across column axis)
    w_ref : (Dp, 2*tn)      fused [Wp^T cols | Wg^T cols] for this column block
    b_ref : (1, 2*tn)       fused [bp | bg] for this column block
    o_ref : (row_tile, tn)
    """
    tn = o_ref.shape[-1]
    dp = x_ref.shape[-1]
    n_col = dp // tn
    j = pl.program_id(1)

    x = x_ref[...]
    xm = x if x.dtype == w_ref.dtype else x.astype(w_ref.dtype)

    # Single fused MXU matmul covering both the proj and gate columns.
    y = jnp.dot(xm, w_ref[...], preferred_element_type=jnp.float32) + b_ref[...]

    proj = jnp.maximum(y[:, :tn], 0.0)      # relu     (VPU)
    gate = jax.nn.sigmoid(y[:, tn:])        # sigmoid  (EUP)

    # Residual x columns matching this output block.  n_col is static and
    # small; a select chain over static slices avoids dynamic lane-dim slicing.
    xr = x[:, :tn]
    for k in range(1, n_col):
        xr = jnp.where(j == k, x[:, k * tn:(k + 1) * tn], xr)
    xr = xr.astype(jnp.float32)

    # out = gate*proj + (1-gate)*x  ==  x + gate*(proj - x)
    o_ref[...] = (xr + gate * (proj - xr)).astype(o_ref.dtype)


# ---------------------------------------------------------------------------
# Tiling / sizing helpers
# ---------------------------------------------------------------------------
def _round_up(n, m):
    return ((n + m - 1) // m) * m


def _cdiv(a, b):
    return (a + b - 1) // b


def _vmem_budget_bytes():
    """Per-core VMEM budget with ~15% headroom for compiler scratch."""
    cap = 64 << 20  # conservative default (v7x: 64 MiB per TensorCore)
    try:
        kind = jax.devices()[0].device_kind.lower()
        if any(t in kind for t in ("v5 lite", "v5e", "v6", "trillium")):
            cap = 128 << 20  # v5e / v6e
    except Exception:
        pass
    return int(cap * 0.85)


def _largest_tile(total, pref, quantum):
    """Largest multiple of `quantum` dividing `total`, <= pref (>= quantum)."""
    t = max(quantum, min(pref, total) // quantum * quantum)
    while t > quantum and total % t != 0:
        t -= quantum
    return t


def _footprint_bytes(row_tile, dp, tn, x_item, w_item):
    """Conservative VMEM footprint (assumes double buffering everywhere)."""
    return int(
        2 * row_tile * dp * x_item          # x tile (double-buffered)
        + 2 * dp * (2 * tn) * w_item        # fused weight block
        + 2 * (2 * tn) * 4                  # fused bias block
        + 2 * row_tile * tn * x_item        # out tile (double-buffered)
        + 2 * row_tile * (2 * tn) * 4       # f32 matmul result + epilogue temps
        + (2 << 20)                         # misc headroom
    )


def _choose_tiles(dp, w_item, budget):
    """Pick (max_row_tile, column_tile) so the footprint fits the budget."""
    rt = 1024 if budget >= (100 << 20) else 512   # bigger tiles on 128-MiB chips
    tn = _largest_tile(dp, 512, 128)
    while _footprint_bytes(rt, dp, tn, 4, w_item) > budget:
        if rt > 128:
            rt = max(128, _round_up(rt // 2, 8))
        elif tn > 128:
            tn = _largest_tile(dp, tn // 2, 128)
        else:
            break
    return rt, tn


def _pick_row_tile(m, rt_max):
    """Row tile: prefer a divisor of M (no padded activation copy when the
    feature dim is lane-aligned), keep >=2 grid steps for the parallel row
    axis (v7x megacore) when M >= 16, stay within the VMEM-derived maximum."""
    upper = rt_max
    if m >= 16:
        upper = min(upper, max(8, _round_up(_cdiv(m, 2), 8)))
    if m % 8 == 0:
        t = max(8, min(upper, m) // 8 * 8)
        while t >= 64:
            if m % t == 0:
                return t
            t -= 8
    return max(8, min(upper, _round_up(m, 8)))


def _maybe_single_buffered(shape, index_map, single_buffer):
    """BlockSpec; request one VMEM buffer for constant-index operands."""
    if single_buffer:
        try:
            return pl.BlockSpec(shape, index_map, pipeline_mode=pl.Buffered(1))
        except (TypeError, AttributeError):
            pass  # older JAX: fall back to default double buffering
    return pl.BlockSpec(shape, index_map)


# ---------------------------------------------------------------------------
# One-time weight packing (hoisted out of the per-call path)
# ---------------------------------------------------------------------------
def _pack_weights(wproj, bproj, wgate, bgate, dp, tn, w_dtype):
    d = wproj.shape[0]
    n_col = dp // tn
    wp_t = jnp.zeros((dp, dp), jnp.float32).at[:d, :d].set(
        jnp.asarray(wproj, jnp.float32).T)
    wg_t = jnp.zeros((dp, dp), jnp.float32).at[:d, :d].set(
        jnp.asarray(wgate, jnp.float32).T)
    # Interleave proj/gate column blocks so column tile j holds
    # [Wp^T[:, j*tn:(j+1)*tn] | Wg^T[:, j*tn:(j+1)*tn]].
    w_fused = jnp.concatenate(
        [wp_t.reshape(dp, n_col, tn), wg_t.reshape(dp, n_col, tn)], axis=-1
    ).reshape(dp, 2 * dp).astype(w_dtype)

    bp = jnp.zeros((dp,), jnp.float32).at[:d].set(jnp.asarray(bproj, jnp.float32))
    bg = jnp.zeros((dp,), jnp.float32).at[:d].set(jnp.asarray(bgate, jnp.float32))
    b_fused = jnp.concatenate(
        [bp.reshape(n_col, tn), bg.reshape(n_col, tn)], axis=-1
    ).reshape(1, 2 * dp)
    return w_fused, b_fused


# ---------------------------------------------------------------------------
# pallas_call wrapper (jitted; all tiling parameters are static)
# ---------------------------------------------------------------------------
@functools.partial(jax.jit,
                   static_argnames=("Dp", "tn", "row_tile", "vmem_limit"))
def _highway_call(x, w_fused, b_fused, *, Dp, tn, row_tile, vmem_limit):
    B, S, D = x.shape
    M = B * S
    Mp = _round_up(M, row_tile)
    n_col = Dp // tn
    n_row = Mp // row_tile

    x2d = x.reshape(M, D)
    padded = (Mp != M) or (Dp != D)
    xp = (jnp.zeros((Mp, Dp), x.dtype).at[:M, :D].set(x2d) if padded else x2d)

    x_item = jnp.dtype(x.dtype).itemsize
    w_item = jnp.dtype(w_fused.dtype).itemsize
    cost = pl.CostEstimate(
        flops=int(2 * Mp * Dp * (2 * Dp)),
        transcendentals=int(Mp * Dp),
        bytes_accessed=int(2 * Mp * Dp * x_item
                           + (n_row if n_col > 1 else 1) * Dp * 2 * Dp * w_item
                           + 2 * Dp * 4),
    )

    single_buffer = (n_col == 1)  # weight/bias block index constant over grid
    out2d = pl.pallas_call(
        highway_kernel,
        out_shape=jax.ShapeDtypeStruct((Mp, Dp), x.dtype),
        grid_spec=pltpu.PrefetchScalarGridSpec(
            num_scalar_prefetch=0,
            grid=(n_row, n_col),
            in_specs=[
                pl.BlockSpec((row_tile, Dp), lambda i, j: (i, 0)),
                _maybe_single_buffered((Dp, 2 * tn), lambda i, j: (0, j),
                                       single_buffer),
                _maybe_single_buffered((1, 2 * tn), lambda i, j: (0, j),
                                       single_buffer),
            ],
            out_specs=pl.BlockSpec((row_tile, tn), lambda i, j: (i, j)),
        ),
        compiler_params=pltpu.CompilerParams(
            dimension_semantics=("parallel", "arbitrary"),
            vmem_limit_bytes=vmem_limit,
        ),
        cost_estimate=cost,
    )(xp, w_fused, b_fused)

    if padded:
        out2d = out2d[:M, :D]
    return out2d.reshape(B, S, D)


# ---------------------------------------------------------------------------
# Public API
# ---------------------------------------------------------------------------
def make_highway(wproj, bproj, wgate, bgate, *, mxu_dtype=None):
    """Build a Highway forward callable.

    The fused/transposed/padded weight slab is constructed ONCE here (hoisted
    out of the per-call path).  wproj/wgate are PyTorch-layout (out, in).
    `mxu_dtype` optionally sets the MXU operand dtype (e.g. jnp.bfloat16 for a
    throughput/precision trade-off on f32 inputs); default keeps the parameter
    dtype so results match a float32 PyTorch module.
    """
    wproj = jnp.asarray(wproj)
    wgate = jnp.asarray(wgate)
    D = wproj.shape[0]
    Dp = _round_up(max(D, 128), 128)

    w_dtype = jnp.dtype(mxu_dtype) if mxu_dtype is not None else jnp.dtype(wproj.dtype)
    budget = _vmem_budget_bytes()
    rt_max, tn = _choose_tiles(Dp, w_dtype.itemsize, budget)

    w_fused, b_fused = _pack_weights(wproj, bproj, wgate, bgate, Dp, tn, w_dtype)

    def apply(x):
        assert x.ndim == 3 and x.shape[-1] == D, "expected (batch, seq, D) input"
        M = x.shape[0] * x.shape[1]
        row_tile = _pick_row_tile(M, rt_max)
        need = _footprint_bytes(row_tile, Dp, tn,
                                jnp.dtype(x.dtype).itemsize, w_dtype.itemsize)
        vmem_limit = int(min(max(need, 32 << 20), budget))
        return _highway_call(x, w_fused, b_fused,
                             Dp=Dp, tn=tn, row_tile=row_tile,
                             vmem_limit=vmem_limit)

    return apply


def highway_forward(x, wproj, bproj, wgate, bgate, *, mxu_dtype=None):
    """One-shot convenience wrapper (for repeated calls prefer make_highway)."""
    return make_highway(wproj, bproj, wgate, bgate, mxu_dtype=mxu_dtype)(x)


def _reference(x, wproj, bproj, wgate, bgate):
    hp = jax.lax.Precision.HIGHEST
    proj = jax.nn.relu(jnp.einsum("bsd,od->bso", x, wproj, precision=hp) + bproj)
    gate = jax.nn.sigmoid(jnp.einsum("bsd,od->bso", x, wgate, precision=hp) + bgate)
    return gate * proj + (1.0 - gate) * x


if __name__ == "__main__":
    B, S, D = 2, 8, 32  # batch, max_sentence_length, D_in

    key = jax.random.PRNGKey(0)
    kx, kwp, kbp, kwg, kbg = jax.random.split(key, 5)

    # PyTorch Linear default init: U(-1/sqrt(D), 1/sqrt(D))
    bound = 1.0 / jnp.sqrt(jnp.float32(D))
    wproj = jax.random.uniform(kwp, (D, D), jnp.float32, -bound, bound)
    bproj = jax.random.uniform(kbp, (D,), jnp.float32, -bound, bound)
    wgate = jax.random.uniform(kwg, (D, D), jnp.float32, -bound, bound)
    bgate = jax.random.uniform(kbg, (D,), jnp.float32, -bound, bound)

    x = jax.random.normal(kx, (B, S, D), jnp.float32)

    highway = make_highway(wproj, bproj, wgate, bgate)   # weights packed once
    out = jax.block_until_ready(highway(x))

    ref = _reference(x, wproj, bproj, wgate, bgate)
    assert out.shape == (B, S, D)
    assert jnp.allclose(out, ref, atol=1e-4, rtol=1e-4), "mismatch vs reference"

    print("KERNEL_OK")
</pallas_src>

<mosaic_0001>
module attributes {stable_mosaic.version = 11 : i64} {
  func.func @highway_kernel(%arg0: i32, %arg1: i32, %arg2: memref<8x128xf32, #tpu.memory_space<vmem>>, %arg3: memref<128x256xf32, #tpu.memory_space<vmem>>, %arg4: memref<1x256xf32, #tpu.memory_space<vmem>>, %arg5: memref<8x128xf32, #tpu.memory_space<vmem>>) attributes {dimension_semantics = [#tpu.dimension_semantics<parallel>, #tpu.dimension_semantics<arbitrary>], iteration_bounds = array<i64: 2, 1>, scalar_prefetch = 0 : i64, scratch_operands = 0 : i64, tpu.core_type = #tpu.core_type<tc>, window_params = [{transform_indices = @transform_0, window_bounds = array<i64: 8, 128>}, {pipeline_mode = #tpu.pipeline_mode<synchronous>, transform_indices = @transform_1, window_bounds = array<i64: 128, 256>}, {pipeline_mode = #tpu.pipeline_mode<synchronous>, transform_indices = @transform_2, window_bounds = array<i64: 1, 256>}, {transform_indices = @transform_3, window_bounds = array<i64: 8, 128>}]} {
    %c0 = arith.constant 0 : index
    %c0_0 = arith.constant 0 : index
    %0 = vector.load %arg2[%c0, %c0_0] : memref<8x128xf32, #tpu.memory_space<vmem>>, vector<8x128xf32>
    %c0_1 = arith.constant 0 : index
    %c0_2 = arith.constant 0 : index
    %1 = vector.load %arg3[%c0_1, %c0_2] : memref<128x256xf32, #tpu.memory_space<vmem>>, vector<128x256xf32>
    %cst = arith.constant dense<0.000000e+00> : vector<8x256xf32>
    %2 = tpu.matmul %0, %1, %cst {dimension_numbers = #tpu.dot_dimension_numbers<[1], [0], [0], [1], [0, 0, 1, 1], [], []>} : vector<8x128xf32>, vector<128x256xf32>, vector<8x256xf32> -> vector<8x256xf32>
    %c0_3 = arith.constant 0 : index
    %c0_4 = arith.constant 0 : index
    %3 = vector.load %arg4[%c0_3, %c0_4] : memref<1x256xf32, #tpu.memory_space<vmem>>, vector<1x256xf32>
    %4 = vector.broadcast %3 : vector<1x256xf32> to vector<8x256xf32>
    %5 = arith.addf %2, %4 : vector<8x256xf32>
    %6 = vector.extract_strided_slice %5 {offsets = [0, 0], sizes = [8, 128], strides = [1, 1]} : vector<8x256xf32> to vector<8x128xf32>
    %cst_5 = arith.constant 0.000000e+00 : f32
    %7 = vector.broadcast %cst_5 : f32 to vector<8x128xf32>
    %8 = arith.maximumf %6, %7 : vector<8x128xf32>
    %9 = vector.extract_strided_slice %5 {offsets = [0, 128], sizes = [8, 128], strides = [1, 1]} : vector<8x256xf32> to vector<8x128xf32>
    %10 = arith.negf %9 : vector<8x128xf32>
    %11 = math.exp %10 : vector<8x128xf32>
    %cst_6 = arith.constant 1.000000e+00 : f32
    %12 = vector.broadcast %cst_6 : f32 to vector<8x128xf32>
    %13 = arith.addf %12, %11 : vector<8x128xf32>
    %14 = arith.divf %12, %13 : vector<8x128xf32>
    %15 = arith.subf %8, %0 : vector<8x128xf32>
    %16 = arith.mulf %14, %15 : vector<8x128xf32>
    %17 = arith.addf %0, %16 : vector<8x128xf32>
    %c0_7 = arith.constant 0 : index
    %c0_8 = arith.constant 0 : index
    %18 = vector.load %arg5[%c0_7, %c0_8] : memref<8x128xf32, #tpu.memory_space<vmem>>, vector<8x128xf32>
    tpu.vector_store %arg5[%c0_7, %c0_8], %17 {strides = array<i32>} : memref<8x128xf32, #tpu.memory_space<vmem>>, vector<8x128xf32>,
    return
  }
  func.func @transform_0(%arg0: i32, %arg1: i32) -> (i32, i32) {
    %c0_i32 = arith.constant 0 : i32
    %c0_i32_0 = arith.constant 0 : i32
    return %arg0, %c0_i32 : i32, i32
  }
  func.func @transform_1(%arg0: i32, %arg1: i32) -> (i32, i32) {
    %c0_i32 = arith.constant 0 : i32
    %c0_i32_0 = arith.constant 0 : i32
    return %c0_i32, %arg1 : i32, i32
  }
  func.func @transform_2(%arg0: i32, %arg1: i32) -> (i32, i32) {
    %c0_i32 = arith.constant 0 : i32
    %c0_i32_0 = arith.constant 0 : i32
    return %c0_i32, %arg1 : i32, i32
  }
  func.func @transform_3(%arg0: i32, %arg1: i32) -> (i32, i32) {
    %c0_i32 = arith.constant 0 : i32
    return %arg0, %arg1 : i32, i32
  }
}

</mosaic_0001>

<llo_original>
// kernel: _highway_call.1
$region0: #{_highway_call.1}
  #allocation0 [shape = 'u32[]', space=smem, size = 0x4, offset = 0x4, fixed_abs, tag = 'smem constant byte address 0x4 - core index']
  #allocation1 [shape = 'u32[72,128]{1,0:T(1,128)}', space=vmem, size = 0x9000, scoped, tag = 'internal scratch']
  %s0 = inlined_call_operand.vmem [shape: f32[16,128], index: 0, kind: input, shape index: {}]
  %s1 = inlined_call_operand.hbm [shape: f32[128,256], index: 1, kind: input, shape index: {}]
  %s2 = inlined_call_operand.vmem [shape: f32[1,256], index: 2, kind: input, shape index: {}]
  %s3 = inlined_call_operand.vmem [shape: f32[16,128], index: 3, kind: output, shape index: {}]
  %s4 = sld [smem:[#allocation0]]
  $region49: #{_highway_call.1} parent=0
    _
  %s6 = ssub.s32 1, %s4
  %s7 = scalar_select 0, %s6, %s4
  $region1: #{_highway_call.1} parent=0
    #allocation2 [shape = 'u8[131072]{0}', space=vmem, size = 0x20000, scoped, tag = 'input window, operand 1, single buffered']
    #allocation3 [shape = 's32[2]{0}', space=sflag, size = 0x8, scoped, tag = 'scoped memory for _highway_call.1']
    %8 = vsyncpa [#allocation3], 0
    loop: start=0, step=1, limit=4
    $region2: #{_highway_call.1} parent=1 // loop_pre_header
      _
    $region3: #{_highway_call.1} parent=1 // loop_header
      %s10 = sphi 0, %s14
      %p11 = scmp.ge.s32.totalorder %s10, 4
      %s17 = sphi 0, %s29
      %s18 = sphi 0, %s25
      %s19 = sphi 0, %s17
      %s20 = sphi 0, %s18
      %s21 = sphi 0, %s19
      %s22 = sphi 0, %s20
      %s32 = sphi 0, %s34
      %s35 = sphi 0, %s32
      %s36 = sphi 0, %s35
      %s52 = sphi 0, %s36
      %s58 = sphi 0, %s60
      %s61 = sphi 0, %s58
      %s62 = sphi 0, %s61
      %s78 = sphi 0, %s62
      %s84 = sphi 0, %s86
      %s87 = sphi 0, %s84
      %s88 = sphi 0, %s87
      %s104 = sphi 0, %s88
      %s112 = sphi 0, %s114
      %s115 = sphi 0, %s112
      %s116 = sphi 0, %s115
      %s132 = sphi 0, %s116
    $region4: #{_highway_call.1} parent=1 // loop_header_branch
      %13 = sbr.rel (%p11) target = $region8
    $region5: #{_highway_call.1} parent=1 // loop_body
      %s15 = ssub.s32 %s10, 1
      %s16 = ssub.s32 %s10, 2
      %s23 = sadd.s32 1, %s18
      %p24 = scmp.ge.s32.totalorder %s23, 1
      %s25 = scalar_select %p24, 0, %s23
      %s26 = sadd.s32 1, %s17
      %s27 = scalar_select %p24, %s26, %s17
      %p28 = scmp.ge.s32.totalorder %s27, 2
      %s29 = scalar_select %p28, 0, %s27
      %s30 = ssub.s32 %s17, %s29
      %p31 = scmp.eq.s32.totalorder %s30, 0
      %s33 = sadd.s32 %s32, 1
      %s34 = scalar_select %p31, %s32, %s33
      %p37 = pneg %p31
      %p38 = scmp.eq.s32.totalorder %s10, 1
      %p39 = por %p37, %p38
      %p40 = scmp.ne.s32.totalorder %s32, %s35
      %p41 = scmp.eq.s32.totalorder %s10, 0
      %p42 = por %p40, %p41
      %p43 = scmp.ne.s32.totalorder %s32, %s35
      %p44 = scmp.eq.s32.totalorder %s15, 1
      %p45 = por %p43, %p44
      %p46 = scmp.ne.s32.totalorder %s35, %s36
      %p47 = scmp.eq.s32.totalorder %s15, 0
      %p48 = por %p46, %p47
      %p49 = scmp.ne.s32.totalorder %s35, %s36
      %p50 = scmp.eq.s32.totalorder %s16, 1
      %p51 = por %p49, %p50
      %p53 = scmp.ne.s32.totalorder %s36, %s52
      %p54 = scmp.eq.s32.totalorder %s16, 0
      %p55 = por %p53, %p54
      %s56 = ssub.s32 %s18, %s25
      %p57 = scmp.eq.s32.totalorder %s56, 0
      %s59 = sadd.s32 %s58, 1
      %s60 = scalar_select %p57, %s58, %s59
      %p63 = pneg %p57
      %p64 = scmp.eq.s32.totalorder %s10, 1
      %p65 = por %p63, %p64
      %p66 = scmp.ne.s32.totalorder %s58, %s61
      %p67 = scmp.eq.s32.totalorder %s10, 0
      %p68 = por %p66, %p67
      %p69 = scmp.ne.s32.totalorder %s58, %s61
      %p70 = scmp.eq.s32.totalorder %s15, 1
      %p71 = por %p69, %p70
      %p72 = scmp.ne.s32.totalorder %s61, %s62
      %p73 = scmp.eq.s32.totalorder %s15, 0
      %p74 = por %p72, %p73
      %p75 = scmp.ne.s32.totalorder %s61, %s62
      %p76 = scmp.eq.s32.totalorder %s16, 1
      %p77 = por %p75, %p76
      %p79 = scmp.ne.s32.totalorder %s62, %s78
      %p80 = scmp.eq.s32.totalorder %s16, 0
      %p81 = por %p79, %p80
      %s82 = ssub.s32 %s18, %s25
      %p83 = scmp.eq.s32.totalorder %s82, 0
      %s85 = sadd.s32 %s84, 1
      %s86 = scalar_select %p83, %s84, %s85
      %p89 = pneg %p83
      %p90 = scmp.eq.s32.totalorder %s10, 1
      %p91 = por %p89, %p90
      %p92 = scmp.ne.s32.totalorder %s84, %s87
      %p93 = scmp.eq.s32.totalorder %s10, 0
      %p94 = por %p92, %p93
      %p95 = scmp.ne.s32.totalorder %s84, %s87
      %p96 = scmp.eq.s32.totalorder %s15, 1
      %p97 = por %p95, %p96
      %p98 = scmp.ne.s32.totalorder %s87, %s88
      %p99 = scmp.eq.s32.totalorder %s15, 0
      %p100 = por %p98, %p99
      %p101 = scmp.ne.s32.totalorder %s87, %s88
      %p102 = scmp.eq.s32.totalorder %s16, 1
      %p103 = por %p101, %p102
      %p105 = scmp.ne.s32.totalorder %s88, %s104
      %p106 = scmp.eq.s32.totalorder %s16, 0
      %p107 = por %p105, %p106
      %s108 = ssub.s32 %s17, %s29
      %s109 = ssub.s32 %s18, %s25
      %s110 = sor.u32 %s108, %s109
      %p111 = scmp.eq.s32.totalorder %s110, 0
      %s113 = sadd.s32 %s112, 1
      %s114 = scalar_select %p111, %s112, %s113
      %p117 = pneg %p111
      %p118 = scmp.eq.s32.totalorder %s10, 1
      %p119 = por %p117, %p118
      %p120 = scmp.ne.s32.totalorder %s112, %s115
      %p121 = scmp.eq.s32.totalorder %s10, 0
      %p122 = por %p120, %p121
      %p123 = scmp.ne.s32.totalorder %s112, %s115
      %p124 = scmp.eq.s32.totalorder %s15, 1
      %p125 = por %p123, %p124
      %p126 = scmp.ne.s32.totalorder %s115, %s116
      %p127 = scmp.eq.s32.totalorder %s15, 0
      %p128 = por %p126, %p127
      %p129 = scmp.ne.s32.totalorder %s115, %s116
      %p130 = scmp.eq.s32.totalorder %s16, 1
      %p131 = por %p129, %p130
      %p133 = scmp.ne.s32.totalorder %s116, %s132
      %p134 = scmp.eq.s32.totalorder %s16, 0
      %p135 = por %p133, %p134
      %p136 = scmp.le.s32.totalorder 1, %s10
      %p137 = scmp.lt.s32.totalorder %s10, 3
      %p138 = pnand %p136, %p137
      %p139 = pneg %p138
      // Predicated region
      $region9: #{_highway_call.1} parent=5 // pred_check
        _
      $region10: #{_highway_call.1} parent=5 // pred_check_branch
        %141 = sbr.rel (%p138) target = $region12
      $region11: #{_highway_call.1} parent=5 // pred_region
        %s142 = ssub.s32 %s10, 1
        // Predicated region
        $region13: #{_highway_call.1} parent=11 // pred_check
          %p143 = pneg %p74
        $region14: #{_highway_call.1} parent=11 // pred_check_branch
          %145 = sbr.rel (%p143) target = $region16
        $region15: #{_highway_call.1} parent=11 // pred_region
          %s146 = smul.u32 2, %s20
          %148 = vsyncadd [#allocation3], 0
          %s149 = smul.addr %s146, 8
          %s150 = scalar_lea.hbm %s1, %s149
          %s151 = sshll.u32 %s150, 4
          %s152 = int_to_ptr.hbm [resolvable:$true] %s151
          %s153 = sshll.u32 [#allocation2], 4
          %s154 = int_to_ptr.vmem [resolvable:$true] %s153
          %159 = dma.hbm_to_vmem [thread:$0]  %s152, 4096, %s154, [#allocation3], 256, 256, 16
        $region16: #{_highway_call.1} parent=11 // pred_fallthru
          _
        // Predicated region
        $region17: #{_highway_call.1} parent=11 // pred_check
          %p160 = pneg %p100
        $region18: #{_highway_call.1} parent=11 // pred_check_branch
          %162 = sbr.rel (%p160) target = $region20
        $region19: #{_highway_call.1} parent=11 // pred_region
          %s163 = smul.u32 2, %s20
          %p164 = scmp.lt.s32.totalorder %s163, 1
          %s165 = scalar_select %p164, %s163, 1
          %s166 = scalar_lea.vmem %s2, %s165
          %s167 = smul.u32 2, %s20
        $region20: #{_highway_call.1} parent=11 // pred_fallthru
          _
      $region12: #{_highway_call.1} parent=5 // pred_fallthru
        _
      %p168 = scmp.lt.s32.totalorder %s10, 2
      // Predicated region
      $region21: #{_highway_call.1} parent=5 // pred_check
        %p169 = pneg %p168
      $region22: #{_highway_call.1} parent=5 // pred_check_branch
        %171 = sbr.rel (%p169) target = $region24
      $region23: #{_highway_call.1} parent=5 // pred_region
        // Predicated region
        $region25: #{_highway_call.1} parent=23 // pred_check
          %p172 = pneg %p42
        $region26: #{_highway_call.1} parent=23 // pred_check_branch
          %174 = sbr.rel (%p172) target = $region28
        $region27: #{_highway_call.1} parent=23 // pred_region
          %p175 = scmp.lt.s32.totalorder %s17, 1
          %s176 = scalar_select %p175, %s17, 1
          %s177 = smul.addr %s176, 8
          %s178 = scalar_lea.vmem %s0, %s177
        $region28: #{_highway_call.1} parent=23 // pred_fallthru
          _
      $region24: #{_highway_call.1} parent=5 // pred_fallthru
        _
      %p179 = scmp.le.s32.totalorder 1, %s10
      %p180 = scmp.lt.s32.totalorder %s10, 3
      %p181 = pnand %p179, %p180
      %p182 = pneg %p181
      // Predicated region
      $region29: #{_highway_call.1} parent=5 // pred_check
        _
      $region30: #{_highway_call.1} parent=5 // pred_check_branch
        %184 = sbr.rel (%p181) target = $region32
      $region31: #{_highway_call.1} parent=5 // pred_region
        %s185 = ssub.s32 %s10, 1
        // Predicated region
        $region33: #{_highway_call.1} parent=31 // pred_check
          %p186 = pneg %p74
        $region34: #{_highway_call.1} parent=31 // pred_check_branch
          %188 = sbr.rel (%p186) target = $region36
        $region35: #{_highway_call.1} parent=31 // pred_region
          %190 = dma.done [#allocation3], 4096
        $region36: #{_highway_call.1} parent=31 // pred_fallthru
          _
        %p191 = scmp.lt.s32.totalorder %s19, 1
        %s192 = scalar_select %p191, %s19, 1
        %s193 = smul.addr %s192, 8
        %s194 = scalar_lea.vmem %s0, %s193
        %p195 = pneg %p48
        %p196 = pneg %p45
        %p197 = pneg %p74
        %p198 = pneg %p71
        %s199 = smul.u32 2, %s20
        %p200 = scmp.lt.s32.totalorder %s199, 1
        %s201 = scalar_select %p200, %s199, 1
        %s202 = scalar_lea.vmem %s2, %s201
        %p203 = pneg %p100
        %p204 = pneg %p97
        %p205 = pneg %p128
        %p206 = pneg %p125
        %p207 = scmp.lt.s32.totalorder %s19, 1
        %s208 = scalar_select %p207, %s19, 1
        %p209 = scmp.lt.s32.totalorder %s20, 0
        %s210 = scalar_select %p209, %s20, 0
        %s211 = sadd.s32 %s210, %s208
        %s212 = smul.addr %s211, 8
        %s213 = scalar_lea.vmem %s3, %s212
        %p214 = scmp.lt.s32.totalorder %s19, 1
        %s215 = scalar_select %p214, %s19, 1
        %s216 = smul.addr %s215, 8
        %s217 = scalar_lea.vmem %s0, %s216
        %s218 = smul.u32 2, %s20
        %s219 = smul.u32 2, %s20
        %p220 = scmp.lt.s32.totalorder %s219, 1
        %s221 = scalar_select %p220, %s219, 1
        %s222 = scalar_lea.vmem %s2, %s221
        %s223 = smul.u32 2, %s20
        %p224 = scmp.lt.s32.totalorder %s19, 1
        %s225 = scalar_select %p224, %s19, 1
        %p226 = scmp.lt.s32.totalorder %s20, 0
        %s227 = scalar_select %p226, %s20, 0
        %s228 = sadd.s32 %s227, %s225
        %s229 = smul.addr %s228, 8
        %s230 = scalar_lea.vmem %s3, %s229
        %v231 = vld [vmem:[%s217] sm:$0xff]
        %v232 = vld [vmem:[#allocation2] sm:$0xff]
        %v233 = vld [vmem:[#allocation2 + $0x8] sm:$0xff]
        %v234 = vld [vmem:[#allocation2 + $0x10] sm:$0xff]
        %v235 = vld [vmem:[#allocation2 + $0x18] sm:$0xff]
        %v236 = vld [vmem:[#allocation2 + $0x20] sm:$0xff]
        %v237 = vld [vmem:[#allocation2 + $0x28] sm:$0xff]
        %v238 = vld [vmem:[#allocation2 + $0x30] sm:$0xff]
        %v239 = vld [vmem:[#allocation2 + $0x38] sm:$0xff]
        %v240 = vld [vmem:[#allocation2 + $0x40] sm:$0xff]
        %v241 = vld [vmem:[#allocation2 + $0x48] sm:$0xff]
        %v242 = vld [vmem:[#allocation2 + $0x50] sm:$0xff]
        %v243 = vld [vmem:[#allocation2 + $0x58] sm:$0xff]
        %v244 = vld [vmem:[#allocation2 + $0x60] sm:$0xff]
        %v245 = vld [vmem:[#allocation2 + $0x68] sm:$0xff]
        %v246 = vld [vmem:[#allocation2 + $0x70] sm:$0xff]
        %v247 = vld [vmem:[#allocation2 + $0x78] sm:$0xff]
        %v248 = vld [vmem:[#allocation2 + $0x80] sm:$0xff]
        %v249 = vld [vmem:[#allocation2 + $0x88] sm:$0xff]
        %v250 = vld [vmem:[#allocation2 + $0x90] sm:$0xff]
        %v251 = vld [vmem:[#allocation2 + $0x98] sm:$0xff]
        %v252 = vld [vmem:[#allocation2 + $0xa0] sm:$0xff]
        %v253 = vld [vmem:[#allocation2 + $0xa8] sm:$0xff]
        %v254 = vld [vmem:[#allocation2 + $0xb0] sm:$0xff]
        %v255 = vld [vmem:[#allocation2 + $0xb8] sm:$0xff]
        %v256 = vld [vmem:[#allocation2 + $0xc0] sm:$0xff]
        %v257 = vld [vmem:[#allocation2 + $0xc8] sm:$0xff]
        %v258 = vld [vmem:[#allocation2 + $0xd0] sm:$0xff]
        %v259 = vld [vmem:[#allocation2 + $0xd8] sm:$0xff]
        %v260 = vld [vmem:[#allocation2 + $0xe0] sm:$0xff]
        %v261 = vld [vmem:[#allocation2 + $0xe8] sm:$0xff]
        %v262 = vld [vmem:[#allocation2 + $0xf0] sm:$0xff]
        %v263 = vld [vmem:[#allocation2 + $0xf8] sm:$0xff]
        %v264 = vld [vmem:[%s222] sm:$0x3]
        %v266 = vperm.slane %v264, 0
        %v267 = vperm.slane %v264, 1
        %270 = vmatpush.msra.mxu0 %v262
        %271 = vmatpush.msra.mxu0 %v260
        %272 = vmatpush.msra.mxu0 %v258
        %273 = vmatpush.msra.mxu0 %v256
        %274 = vmatpush.msra.mxu0 %v254
        %275 = vmatpush.msra.mxu0 %v252
        %276 = vmatpush.msra.mxu0 %v250
        %277 = vmatpush.msra.mxu0 %v248
        %278 = vmatpush.msra.mxu0 %v246
        %279 = vmatpush.msra.mxu0 %v244
        %280 = vmatpush.msra.mxu0 %v242
        %281 = vmatpush.msra.mxu0 %v240
        %282 = vmatpush.msra.mxu0 %v238
        %283 = vmatpush.msra.mxu0 %v236
        %284 = vmatpush.msra.mxu0 %v234
        %285 = vmatpush.msra.mxu0 %v232
        %286 = vmatmul.f32.gmra.mxu0 %v231
        %v287 = vpop.f32.mrf.mxu0
        %v288 = vadd.f32 %v266, %v287
        %289 = vdwg.mxu0
        %290 = vmatpush.msra.mxu0 %v263
        %291 = vmatpush.msra.mxu0 %v261
        %292 = vmatpush.msra.mxu0 %v259
        %293 = vmatpush.msra.mxu0 %v257
        %294 = vmatpush.msra.mxu0 %v255
        %295 = vmatpush.msra.mxu0 %v253
        %296 = vmatpush.msra.mxu0 %v251
        %297 = vmatpush.msra.mxu0 %v249
        %298 = vmatpush.msra.mxu0 %v247
        %299 = vmatpush.msra.mxu0 %v245
        %300 = vmatpush.msra.mxu0 %v243
        %301 = vmatpush.msra.mxu0 %v241
        %302 = vmatpush.msra.mxu0 %v239
        %303 = vmatpush.msra.mxu0 %v237
        %304 = vmatpush.msra.mxu0 %v235
        %305 = vmatpush.msra.mxu0 %v233
        %306 = vmatmul.f32.gmra.mxu0 %v231
        %v307 = vpop.f32.mrf.mxu0
        %v308 = vadd.f32 %v267, %v307
        %309 = vdwg.mxu0
        %v310 = vmax.f32 %v288, 0.0
        %v311 = vxor.u32 %v308, 2147483648
        %v312 = vmul.f32 %v311, 1.442695
        %v313 = vpow.pop %v312
        %v314 = vadd.f32 %v313, 1.0
        %v315 = vrcp.pop %v314
        %v316 = vmul.f32 %v314, %v315
        %v317 = vsub.f32 1.0, %v316
        %v318 = vmul.f32 %v315, %v317
        %v319 = vadd.f32 %v315, %v318
        %vm320 = vweird.f32 %v314
        %vm321 = vweird.f32 %v315
        %vm322 = vmor %vm320, %vm321
        %v323 = vsel %vm322, %v315, %v319
        %v324 = vand.u32 2147483647, %v314
        %vm325 = vcmp.eq.f32.partialorder %v324, 8.507059e+37
        %v326 = vand.u32 %v314, 2147483648
        %v327 = vor.u32 1.1754944e-38, %v326
        %v328 = vsel %vm325, %v327, %v323
        %v329 = vmul.f32 1.0, %v328
        %v330 = vsub.f32 %v310, %v231
        %v331 = vmul.f32 %v329, %v330
        %v332 = vadd.f32 %v231, %v331
        %333 = vst [vmem:[%s230] sm:$0xff] %v332
        %p334 = scmp.lt.s32.totalorder %s19, 1
        %s335 = scalar_select %p334, %s19, 1
        %p336 = scmp.lt.s32.totalorder %s20, 0
        %s337 = scalar_select %p336, %s20, 0
        %s338 = sadd.s32 %s337, %s335
        %s339 = smul.addr %s338, 8
        %s340 = scalar_lea.vmem %s3, %s339
        // Predicated region
        $region37: #{_highway_call.1} parent=31 // pred_check
          %p341 = pneg %p125
        $region38: #{_highway_call.1} parent=31 // pred_check_branch
          %343 = sbr.rel (%p341) target = $region40
        $region39: #{_highway_call.1} parent=31 // pred_region
          _
        $region40: #{_highway_call.1} parent=31 // pred_fallthru
          _
      $region32: #{_highway_call.1} parent=5 // pred_fallthru
        _
      %p344 = scmp.le.s32.totalorder 2, %s10
      // Predicated region
      $region41: #{_highway_call.1} parent=5 // pred_check
        %p345 = pneg %p344
      $region42: #{_highway_call.1} parent=5 // pred_check_branch
        %347 = sbr.rel (%p345) target = $region44
      $region43: #{_highway_call.1} parent=5 // pred_region
        %s348 = ssub.s32 %s10, 2
        // Predicated region
        $region45: #{_highway_call.1} parent=43 // pred_check
          %p349 = pneg %p131
        $region46: #{_highway_call.1} parent=43 // pred_check_branch
          %351 = sbr.rel (%p349) target = $region48
        $region47: #{_highway_call.1} parent=43 // pred_region
          %p352 = scmp.lt.s32.totalorder %s21, 1
          %s353 = scalar_select %p352, %s21, 1
          %p354 = scmp.lt.s32.totalorder %s22, 0
          %s355 = scalar_select %p354, %s22, 0
          %s356 = sadd.s32 %s355, %s353
          %s357 = smul.addr %s356, 8
          %s358 = scalar_lea.vmem %s3, %s357
        $region48: #{_highway_call.1} parent=43 // pred_fallthru
          _
      $region44: #{_highway_call.1} parent=5 // pred_fallthru
        _
    $region6: #{_highway_call.1} parent=1 // loop_footer
      %s14 = sadd.s32 1, %s10
    $region7: #{_highway_call.1} parent=1 // loop_footer_branch
      %9 = sbr.rel target = $region3
    $region8: #{_highway_call.1} parent=1 // loop_exit
      _
    %359 = vsyncpa [#allocation3], 1
    %s360 = scalar_lea.sflag [#allocation3], 1
    %361 = vsyncpa %s360, 1

</llo_original>
